<compile_context>
chip_gen: v6e
topology: v6e:2x2x1
jax: 0.10.0
libtpu: 0.0.40
codegen_flags: <defaults>
</compile_context>

<pallas_src>
import functools
import numpy as np
import jax
import jax.numpy as jnp
from jax.experimental import pallas as pl
from jax.experimental.pallas import tpu as pltpu

# ----- static config (mirrors the argparse `args` of the PyTorch module) -------
NOISE_DIM = 8
USER_ANTENNAS = 2
USER_NUMBERS = 4
OUTPUT_DIM = USER_ANTENNAS * USER_NUMBERS          # 8
EPSILON = 0.1

H = 8                       # rows of channel matrix
CH_W = 34                   # channel matrix width
RW_W = 1                    # reward array width
W_IN = CH_W + RW_W          # 35 after concat along -1
K1, S1 = 5, 1               # conv1: kernel (1,5), stride (1,1)
K2, S2 = 3, 2               # conv2: kernel (1,3), stride (1,2)
W1 = (W_IN - K1) // S1 + 1  # 31
W2 = (W1 - K2) // S2 + 1    # 15
FLAT = H * W2               # 120  (matches "flatten_dim = 120 + noise_dim")
FLATTEN_DIM = FLAT + NOISE_DIM  # 128
SCALE = 1.0e5               # channel scaling, folded into conv1 Toeplitz

W1P = 32                    # per-row width of layer-1 activations (31 -> 32 pad)
W2P = 16                    # per-row width of layer-2 activations (15 + noise slot)
X_FLAT = H * W_IN           # 280
L1_FLAT = H * W1P           # 256
L2_FLAT = H * W2P           # 128


# ------------------------------- Pallas kernel ---------------------------------
def _actor_kernel(noise_ref, x_ref, t1_ref, w_ref, b_ref, out_ref):
    f32 = jnp.float32
    # conv1 (1,5)/stride 1 over every row: one flattened block-Toeplitz matmul
    # (the 1e5 channel scaling and conv1 bias are folded into t1 / b_ref[0]).
    l1 = jnp.tanh(jnp.dot(x_ref[...], t1_ref[...], preferred_element_type=f32)
                  + b_ref[0:1, :])                                    # (1, 256)

    # conv2 (1,3)/stride 2 fused with the noise embedding: lane 16*h+15 of the
    # pre-activation carries noise @ emb_w[:, h] + emb_b[h] (two VPU FMAs from
    # SMEM scalars), so a single tanh covers both paths.
    n0 = noise_ref[0]
    n1 = noise_ref[1]
    l2 = jnp.tanh(jnp.dot(l1, w_ref[0:256, :], preferred_element_type=f32)
                  + b_ref[1:2, 0:128]
                  + n0 * b_ref[5:6, 0:128]
                  + n1 * b_ref[6:7, 0:128])                           # (1, 128)

    # linear1: flatten + concat(noise) is pre-baked into the row layout of the
    # packed weight block, so this is a single (1,128)@(128,128) MXU pass.
    h1 = jnp.tanh(jnp.dot(l2, w_ref[256:384, :], preferred_element_type=f32)
                  + b_ref[2:3, 0:128])                                # (1, 128)
    h2 = jnp.tanh(jnp.dot(h1, w_ref[384:512, :], preferred_element_type=f32)
                  + b_ref[3:4, 0:128])                                # (1, 128) lanes>=32 are 0
    h3 = (jnp.dot(h2, w_ref[512:640, :], preferred_element_type=f32)
          + b_ref[4:5, 0:128])                                        # (1, 128) lanes>=8 unused
    out_ref[...] = (jax.nn.sigmoid(h3) - 0.5) * 0.99 + 0.5            # lane-dense (1, 128)


# --------------------------- constant packing (once) -----------------------------
def _pack_constants(params):
    p = {k: np.asarray(v, np.float32) for k, v in params.items()}
    w1, b1 = p["conv1_w"], p["conv1_b"][0]
    w2, b2 = p["conv2_w"], p["conv2_b"][0]

    # conv1 as a block-diagonal Toeplitz over the row-major flattened input;
    # 1e5 channel scaling folded in (reward column i==34 unscaled).
    t1 = np.zeros((X_FLAT, L1_FLAT), np.float32)
    for h in range(H):
        for j in range(W1):
            for k in range(K1):
                i = j * S1 + k
                s = SCALE if i < CH_W else 1.0
                t1[h * W_IN + i, h * W1P + j] = w1[k] * s

    # conv2 as a block-diagonal (strided) Toeplitz; column 16*h+15 reserved
    # for the noise embedding (stays zero here).
    t2 = np.zeros((L1_FLAT, L2_FLAT), np.float32)
    for h in range(H):
        for w in range(W2):
            for k in range(K2):
                j = w * S2 + k
                t2[h * W1P + j, h * W2P + w] = w2[k]

    # linear1 weights remapped to the padded/interleaved lane layout:
    # lane 16*h+w (w<15) <-> flat index 15*h+w, lane 16*h+15 <-> noise index 120+h.
    w1_big = np.zeros((L2_FLAT, 128), np.float32)
    for h in range(H):
        w1_big[h * W2P: h * W2P + W2, :] = p["l1_w"][h * W2:(h + 1) * W2, :]
        w1_big[h * W2P + W2, :] = p["l1_w"][FLAT + h, :]

    w2_pad = np.zeros((128, 128), np.float32)
    w2_pad[:, :32] = p["l2_w"]
    w3_pad = np.zeros((128, 128), np.float32)
    w3_pad[:32, :OUTPUT_DIM] = p["l3_w"]

    w_slab = np.concatenate([t2, w1_big, w2_pad, w3_pad], axis=0)      # (640, 128)

    # Packed bias / scatter rows.
    b_slab = np.zeros((8, 256), np.float32)
    for h in range(H):
        b_slab[0, h * W1P: h * W1P + W1] = b1                          # conv1 bias
        b_slab[1, h * W2P: h * W2P + W2] = b2                          # conv2 bias
        b_slab[1, h * W2P + W2] = p["emb_b"][h]                        # noise bias
        b_slab[5, h * W2P + W2] = p["emb_w"][0, h]                     # noise w row 0
        b_slab[6, h * W2P + W2] = p["emb_w"][1, h]                     # noise w row 1
    b_slab[2, :128] = p["l1_b"]
    b_slab[3, :32] = p["l2_b"]
    b_slab[4, :OUTPUT_DIM] = p["l3_b"]

    return jnp.asarray(t1), jnp.asarray(w_slab), jnp.asarray(b_slab)


# ----------------------------------- glue ---------------------------------------
def make_actor(params):
    """Pack constants once; return (probs_fn, forward_fn), both jitted."""
    t1_big, w_slab, b_slab = _pack_constants(params)

    vmem = pl.BlockSpec(memory_space=pltpu.MemorySpace.VMEM)
    smem = pl.BlockSpec(memory_space=pltpu.MemorySpace.SMEM)
    kernel_fn = pl.pallas_call(
        _actor_kernel,
        out_shape=jax.ShapeDtypeStruct((1, 128), jnp.float32),
        in_specs=[smem, vmem, vmem, vmem, vmem],
        out_specs=vmem,
    )

    @jax.jit
    def probs(channel_matrix, reward_array, noise):
        x_row = jnp.concatenate(
            [channel_matrix.astype(jnp.float32), reward_array.astype(jnp.float32)],
            axis=-1).reshape(1, X_FLAT)
        out = kernel_fn(noise.astype(jnp.float32), x_row, t1_big, w_slab, b_slab)
        return out[0, :OUTPUT_DIM]                                    # (8,)

    @functools.partial(jax.jit, static_argnames=("eval_mode",))
    def forward(channel_matrix, reward_array, noise, key, eval_mode=False):
        output = probs(channel_matrix, reward_array, noise)
        k1, k2 = jax.random.split(key)
        if eval_mode:
            explore = jnp.asarray(False)
        else:
            explore = jax.random.uniform(k1, ()) < EPSILON
        # multinomial over stack(1-p, p) per element == bernoulli(p)
        sampled = jax.random.bernoulli(k2, output).astype(jnp.int32)
        greedy = (output >= 0.5).astype(jnp.int32)
        result = jnp.where(explore, sampled, greedy)
        prob_ = jnp.where(result == 1, output, 1.0 - output)
        log_prob = jnp.sum(jnp.log(prob_))        # == log(prod), underflow-safe
        # TODO(synk): torch.where(result==1)[0] has a data-dependent shape;
        # return a fixed-size index list padded with -1 instead.
        schedule_result = jnp.nonzero(result == 1, size=OUTPUT_DIM, fill_value=-1)[0]
        return log_prob, schedule_result

    return probs, forward


# --------------------------- pure-JAX reference (check) --------------------------
def actor_probs_ref(params, channel_matrix, reward_array, noise):
    x = jnp.concatenate([SCALE * channel_matrix, reward_array], axis=-1)
    w1, b1 = params["conv1_w"], params["conv1_b"][0]
    l1 = jnp.tanh(jnp.stack([(x[:, j:j + K1] * w1).sum(-1)
                             for j in range(W1)], axis=1) + b1)
    w2, b2 = params["conv2_w"], params["conv2_b"][0]
    l2 = jnp.tanh(jnp.stack([(l1[:, j * S2:j * S2 + K2] * w2).sum(-1)
                             for j in range(W2)], axis=1) + b2)
    en = jnp.tanh(noise @ params["emb_w"] + params["emb_b"])
    flat = jnp.concatenate([l2.reshape(-1), en], 0)
    h1 = jnp.tanh(flat @ params["l1_w"] + params["l1_b"])
    h2 = jnp.tanh(h1 @ params["l2_w"] + params["l2_b"])
    h3 = h2 @ params["l3_w"] + params["l3_b"]
    return (jax.nn.sigmoid(h3) - 0.5) * 0.99 + 0.5


# ------------------------------- parameter init ----------------------------------
def init_params(key):
    def u(k, shape, fan_in):
        bound = 1.0 / np.sqrt(fan_in)
        return jax.random.uniform(k, shape, jnp.float32, -bound, bound)

    ks = jax.random.split(key, 12)
    return {
        "conv1_w": u(ks[0], (K1,), K1),            "conv1_b": u(ks[1], (1,), K1),
        "conv2_w": u(ks[2], (K2,), K2),            "conv2_b": u(ks[3], (1,), K2),
        "emb_w":   u(ks[4], (2, NOISE_DIM), 2),    "emb_b":   u(ks[5], (NOISE_DIM,), 2),
        "l1_w":    u(ks[6], (FLATTEN_DIM, 128), FLATTEN_DIM),
        "l1_b":    u(ks[7], (128,), FLATTEN_DIM),
        "l2_w":    u(ks[8], (128, 32), 128),       "l2_b":    u(ks[9], (32,), 128),
        "l3_w":    u(ks[10], (32, OUTPUT_DIM), 32),
        "l3_b":    u(ks[11], (OUTPUT_DIM,), 32),
    }


if __name__ == "__main__":
    root = jax.random.PRNGKey(0)
    kp, kc, kr, kn, kd = jax.random.split(root, 5)

    params = init_params(kp)
    # channel gains are tiny (hence the 1e5 scaling in the model)
    channel_matrix = 1.0e-5 * jax.random.normal(kc, (H, CH_W), jnp.float32)
    reward_array = jax.random.normal(kr, (H, RW_W), jnp.float32)
    noise = jax.random.normal(kn, (2,), jnp.float32)

    probs_fn, forward_fn = make_actor(params)

    # kernel vs pure-JAX reference for the network output (probabilities)
    probs_pallas = jax.block_until_ready(probs_fn(channel_matrix, reward_array, noise))
    probs_ref = actor_probs_ref(params, channel_matrix, reward_array, noise)
    np.testing.assert_allclose(np.asarray(probs_pallas), np.asarray(probs_ref),
                               rtol=2e-5, atol=5e-5)

    log_prob, schedule_result = forward_fn(channel_matrix, reward_array, noise, kd)
    jax.block_until_ready((log_prob, schedule_result))
    print("KERNEL_OK")
</pallas_src>

<mosaic_0001>
module attributes {stable_mosaic.version = 11 : i64} {
  func.func @_actor_kernel(%arg0: memref<2xf32, #tpu.memory_space<smem>>, %arg1: memref<1x280xf32, #tpu.memory_space<vmem>>, %arg2: memref<280x256xf32, #tpu.memory_space<vmem>>, %arg3: memref<640x128xf32, #tpu.memory_space<vmem>>, %arg4: memref<8x256xf32, #tpu.memory_space<vmem>>, %arg5: memref<1x128xf32, #tpu.memory_space<vmem>>) attributes {dimension_semantics = [], scalar_prefetch = 0 : i64, scratch_operands = 0 : i64, tpu.core_type = #tpu.core_type<tc>} {
    %c0 = arith.constant 0 : index
    %c0_0 = arith.constant 0 : index
    %0 = vector.load %arg1[%c0, %c0_0] : memref<1x280xf32, #tpu.memory_space<vmem>>, vector<1x280xf32>
    %c0_1 = arith.constant 0 : index
    %c0_2 = arith.constant 0 : index
    %1 = vector.load %arg2[%c0_1, %c0_2] : memref<280x256xf32, #tpu.memory_space<vmem>>, vector<280x256xf32>
    %cst = arith.constant dense<0.000000e+00> : vector<1x256xf32>
    %2 = tpu.matmul %0, %1, %cst {dimension_numbers = #tpu.dot_dimension_numbers<[1], [0], [0], [1], [0, 0, 1, 1], [], []>} : vector<1x280xf32>, vector<280x256xf32>, vector<1x256xf32> -> vector<1x256xf32>
    %c0_3 = arith.constant 0 : index
    %c0_4 = arith.constant 0 : index
    %3 = vector.load %arg4[%c0_3, %c0_4] : memref<8x256xf32, #tpu.memory_space<vmem>>, vector<1x256xf32>
    %4 = arith.addf %2, %3 : vector<1x256xf32>
    %5 = math.tanh %4 : vector<1x256xf32>
    %c0_5 = arith.constant 0 : index
    %6 = memref.load %arg0[%c0_5] : memref<2xf32, #tpu.memory_space<smem>>
    %c1 = arith.constant 1 : index
    %7 = memref.load %arg0[%c1] : memref<2xf32, #tpu.memory_space<smem>>
    %c0_6 = arith.constant 0 : index
    %c0_7 = arith.constant 0 : index
    %8 = vector.load %arg3[%c0_6, %c0_7] : memref<640x128xf32, #tpu.memory_space<vmem>>, vector<256x128xf32>
    %cst_8 = arith.constant dense<0.000000e+00> : vector<1x128xf32>
    %9 = tpu.matmul %5, %8, %cst_8 {dimension_numbers = #tpu.dot_dimension_numbers<[1], [0], [0], [1], [0, 0, 1, 1], [], []>} : vector<1x256xf32>, vector<256x128xf32>, vector<1x128xf32> -> vector<1x128xf32>
    %c1_9 = arith.constant 1 : index
    %c0_10 = arith.constant 0 : index
    %10 = vector.load %arg4[%c1_9, %c0_10] : memref<8x256xf32, #tpu.memory_space<vmem>>, vector<1x128xf32>
    %11 = arith.addf %9, %10 : vector<1x128xf32>
    %c5 = arith.constant 5 : index
    %c0_11 = arith.constant 0 : index
    %12 = vector.load %arg4[%c5, %c0_11] : memref<8x256xf32, #tpu.memory_space<vmem>>, vector<1x128xf32>
    %13 = vector.broadcast %6 : f32 to vector<1x128xf32>
    %14 = arith.mulf %13, %12 : vector<1x128xf32>
    %15 = arith.addf %11, %14 : vector<1x128xf32>
    %c6 = arith.constant 6 : index
    %c0_12 = arith.constant 0 : index
    %16 = vector.load %arg4[%c6, %c0_12] : memref<8x256xf32, #tpu.memory_space<vmem>>, vector<1x128xf32>
    %17 = vector.broadcast %7 : f32 to vector<1x128xf32>
    %18 = arith.mulf %17, %16 : vector<1x128xf32>
    %19 = arith.addf %15, %18 : vector<1x128xf32>
    %20 = math.tanh %19 : vector<1x128xf32>
    %c256 = arith.constant 256 : index
    %c0_13 = arith.constant 0 : index
    %21 = vector.load %arg3[%c256, %c0_13] : memref<640x128xf32, #tpu.memory_space<vmem>>, vector<128x128xf32>
    %cst_14 = arith.constant dense<0.000000e+00> : vector<1x128xf32>
    %22 = tpu.matmul %20, %21, %cst_14 {dimension_numbers = #tpu.dot_dimension_numbers<[1], [0], [0], [1], [0, 0, 1, 1], [], []>} : vector<1x128xf32>, vector<128x128xf32>, vector<1x128xf32> -> vector<1x128xf32>
    %c2 = arith.constant 2 : index
    %c0_15 = arith.constant 0 : index
    %23 = vector.load %arg4[%c2, %c0_15] : memref<8x256xf32, #tpu.memory_space<vmem>>, vector<1x128xf32>
    %24 = arith.addf %22, %23 : vector<1x128xf32>
    %25 = math.tanh %24 : vector<1x128xf32>
    %c384 = arith.constant 384 : index
    %c0_16 = arith.constant 0 : index
    %26 = vector.load %arg3[%c384, %c0_16] : memref<640x128xf32, #tpu.memory_space<vmem>>, vector<128x128xf32>
    %cst_17 = arith.constant dense<0.000000e+00> : vector<1x128xf32>
    %27 = tpu.matmul %25, %26, %cst_17 {dimension_numbers = #tpu.dot_dimension_numbers<[1], [0], [0], [1], [0, 0, 1, 1], [], []>} : vector<1x128xf32>, vector<128x128xf32>, vector<1x128xf32> -> vector<1x128xf32>
    %c3 = arith.constant 3 : index
    %c0_18 = arith.constant 0 : index
    %28 = vector.load %arg4[%c3, %c0_18] : memref<8x256xf32, #tpu.memory_space<vmem>>, vector<1x128xf32>
    %29 = arith.addf %27, %28 : vector<1x128xf32>
    %30 = math.tanh %29 : vector<1x128xf32>
    %c512 = arith.constant 512 : index
    %c0_19 = arith.constant 0 : index
    %31 = vector.load %arg3[%c512, %c0_19] : memref<640x128xf32, #tpu.memory_space<vmem>>, vector<128x128xf32>
    %cst_20 = arith.constant dense<0.000000e+00> : vector<1x128xf32>
    %32 = tpu.matmul %30, %31, %cst_20 {dimension_numbers = #tpu.dot_dimension_numbers<[1], [0], [0], [1], [0, 0, 1, 1], [], []>} : vector<1x128xf32>, vector<128x128xf32>, vector<1x128xf32> -> vector<1x128xf32>
    %c4 = arith.constant 4 : index
    %c0_21 = arith.constant 0 : index
    %33 = vector.load %arg4[%c4, %c0_21] : memref<8x256xf32, #tpu.memory_space<vmem>>, vector<1x128xf32>
    %34 = arith.addf %32, %33 : vector<1x128xf32>
    %35 = arith.negf %34 : vector<1x128xf32>
    %36 = math.exp %35 : vector<1x128xf32>
    %cst_22 = arith.constant 1.000000e+00 : f32
    %37 = vector.broadcast %cst_22 : f32 to vector<1x128xf32>
    %38 = arith.addf %37, %36 : vector<1x128xf32>
    %39 = arith.divf %37, %38 : vector<1x128xf32>
    %cst_23 = arith.constant 5.000000e-01 : f32
    %40 = vector.broadcast %cst_23 : f32 to vector<1x128xf32>
    %41 = arith.subf %39, %40 : vector<1x128xf32>
    %cst_24 = arith.constant 9.900000e-01 : f32
    %42 = vector.broadcast %cst_24 : f32 to vector<1x128xf32>
    %43 = arith.mulf %41, %42 : vector<1x128xf32>
    %cst_25 = arith.constant 5.000000e-01 : f32
    %44 = vector.broadcast %cst_25 : f32 to vector<1x128xf32>
    %45 = arith.addf %43, %44 : vector<1x128xf32>
    %c0_26 = arith.constant 0 : index
    %c0_27 = arith.constant 0 : index
    %46 = vector.load %arg5[%c0_26, %c0_27] : memref<1x128xf32, #tpu.memory_space<vmem>>, vector<1x128xf32>
    tpu.vector_store %arg5[%c0_26, %c0_27], %45 {strides = array<i32>} : memref<1x128xf32, #tpu.memory_space<vmem>>, vector<1x128xf32>,
    return
  }
}

</mosaic_0001>

<llo_original>
// kernel: probs.1
$region0: #{probs.1}
  #allocation0 [shape = 'u32[]', space=smem, size = 0x4, offset = 0x4, fixed_abs, tag = 'smem constant byte address 0x4 - core index']
  #allocation1 [shape = 'u32[144,128]{1,0:T(1,128)}', space=vmem, size = 0x12000, scoped, tag = 'internal scratch']
  %s0 = inlined_call_operand.vmem [shape: f32[2], index: 0, kind: input, shape index: {}]
  %s1 = inlined_call_operand.vmem [shape: f32[1,280], index: 1, kind: input, shape index: {}]
  %s2 = inlined_call_operand.hbm [shape: f32[280,256], index: 2, kind: input, shape index: {}]
  %s3 = inlined_call_operand.hbm [shape: f32[640,128], index: 3, kind: input, shape index: {}]
  %s4 = inlined_call_operand.vmem [shape: f32[8,256], index: 4, kind: input, shape index: {}]
  %s5 = inlined_call_operand.vmem [shape: f32[1,128], index: 5, kind: output, shape index: {}]
  %s6 = sld [smem:[#allocation0]]
  $region42: #{probs.1} parent=0
    _
  %s8 = ssub.s32 1, %s6
  %s9 = scalar_select 0, %s8, %s6
  $region1: #{probs.1} parent=0
    #allocation2 [shape = 'u8[512]{0}', space=smem, size = 0x200, scoped, tag = 'input window, operand 0, single buffered']
    #allocation3 [shape = 's32[1]{0}', space=sflag, size = 0x4, scoped, tag = 'scoped memory for probs.1']
    #allocation4 [shape = 's32[1]{0}', space=sflag, size = 0x4, scoped, tag = 'scoped memory for probs.1']
    #allocation5 [shape = 'u8[286720]{0}', space=vmem, size = 0x46000, scoped, tag = 'input window, operand 2, single buffered']
    #allocation6 [shape = 'u8[327680]{0}', space=vmem, size = 0x50000, scoped, tag = 'input window, operand 3, single buffered']
    #allocation7 [shape = 's32[1]{0}', space=sflag, size = 0x4, scoped, tag = 'scoped memory for probs.1']
    %10 = vsyncpa [#allocation4], 0
    %11 = vsyncpa [#allocation3], 0
    %12 = vsyncpa [#allocation7], 0
    // Predicated region
    $region2: #{probs.1} parent=1 // pred_check
      _
    $region3: #{probs.1} parent=1 // pred_check_branch
      %14 = sbr.rel (0) target = $region5
    $region4: #{probs.1} parent=1 // pred_region
      %s16 = ssub.s32 16, 16
      %17 = vsyncadd [#allocation4], %s16
      %s19 = sshll.u32 %s0, 4
      %s20 = int_to_ptr.vmem [resolvable:$true] %s19
      %22 = dma.vmem_to_smem %s20, 16, [#allocation2], [#allocation4]
    $region5: #{probs.1} parent=1 // pred_fallthru
      _
    // Predicated region
    $region6: #{probs.1} parent=1 // pred_check
      _
    $region7: #{probs.1} parent=1 // pred_check_branch
      %24 = sbr.rel (0) target = $region9
    $region8: #{probs.1} parent=1 // pred_region
      _
    $region9: #{probs.1} parent=1 // pred_fallthru
      _
    // Predicated region
    $region10: #{probs.1} parent=1 // pred_check
      _
    $region11: #{probs.1} parent=1 // pred_check_branch
      %26 = sbr.rel (0) target = $region13
    $region12: #{probs.1} parent=1 // pred_region
      %s28 = ssub.s32 8960, 8960
      %29 = vsyncadd [#allocation3], %s28
      %s30 = sshll.u32 [#allocation5], 4
      %s31 = int_to_ptr.vmem [resolvable:$true] %s30
      %36 = dma.hbm_to_vmem [thread:$0]  %s2, 8960, %s31, [#allocation3], 256, 256, 16
    $region13: #{probs.1} parent=1 // pred_fallthru
      _
    // Predicated region
    $region14: #{probs.1} parent=1 // pred_check
      _
    $region15: #{probs.1} parent=1 // pred_check_branch
      %38 = sbr.rel (0) target = $region17
    $region16: #{probs.1} parent=1 // pred_region
      %s40 = ssub.s32 10240, 10240
      %41 = vsyncadd [#allocation7], %s40
      %s42 = sshll.u32 [#allocation6], 4
      %s43 = int_to_ptr.vmem [resolvable:$true] %s42
      %48 = dma.hbm_to_vmem [thread:$0]  %s3, 10240, %s43, [#allocation7], 128, 128, 8
    $region17: #{probs.1} parent=1 // pred_fallthru
      _
    // Predicated region
    $region18: #{probs.1} parent=1 // pred_check
      _
    $region19: #{probs.1} parent=1 // pred_check_branch
      %50 = sbr.rel (0) target = $region21
    $region20: #{probs.1} parent=1 // pred_region
      _
    $region21: #{probs.1} parent=1 // pred_fallthru
      _
    // Predicated region
    $region22: #{probs.1} parent=1 // pred_check
      _
    $region23: #{probs.1} parent=1 // pred_check_branch
      %52 = sbr.rel (0) target = $region25
    $region24: #{probs.1} parent=1 // pred_region
      %53 = dma.done [#allocation4], 16
    $region25: #{probs.1} parent=1 // pred_fallthru
      _
    // Predicated region
    $region26: #{probs.1} parent=1 // pred_check
      _
    $region27: #{probs.1} parent=1 // pred_check_branch
      %55 = sbr.rel (0) target = $region29
    $region28: #{probs.1} parent=1 // pred_region
      %56 = dma.done [#allocation3], 8960
    $region29: #{probs.1} parent=1 // pred_fallthru
      _
    // Predicated region
    $region30: #{probs.1} parent=1 // pred_check
      _
    $region31: #{probs.1} parent=1 // pred_check_branch
      %58 = sbr.rel (0) target = $region33
    $region32: #{probs.1} parent=1 // pred_region
      %59 = dma.done [#allocation7], 10240
    $region33: #{probs.1} parent=1 // pred_fallthru
      _
    %60 = sfence
    %v61 = vld [vmem:[%s1] sm:$0x7]
    %v62 = vld [vmem:[#allocation5] sm:$0xff]
    %v63 = vld [vmem:[#allocation5 + $0x8] sm:$0xff]
    %v64 = vld [vmem:[#allocation5 + $0x10] sm:$0xff]
    %v65 = vld [vmem:[#allocation5 + $0x18] sm:$0xff]
    %v66 = vld [vmem:[#allocation5 + $0x20] sm:$0xff]
    %v67 = vld [vmem:[#allocation5 + $0x28] sm:$0xff]
    %v68 = vld [vmem:[#allocation5 + $0x30] sm:$0xff]
    %v69 = vld [vmem:[#allocation5 + $0x38] sm:$0xff]
    %v70 = vld [vmem:[#allocation5 + $0x40] sm:$0xff]
    %v71 = vld [vmem:[#allocation5 + $0x48] sm:$0xff]
    %v72 = vld [vmem:[#allocation5 + $0x50] sm:$0xff]
    %v73 = vld [vmem:[#allocation5 + $0x58] sm:$0xff]
    %v74 = vld [vmem:[#allocation5 + $0x60] sm:$0xff]
    %v75 = vld [vmem:[#allocation5 + $0x68] sm:$0xff]
    %v76 = vld [vmem:[#allocation5 + $0x70] sm:$0xff]
    %v77 = vld [vmem:[#allocation5 + $0x78] sm:$0xff]
    %v78 = vld [vmem:[#allocation5 + $0x80] sm:$0xff]
    %v79 = vld [vmem:[#allocation5 + $0x88] sm:$0xff]
    %v80 = vld [vmem:[#allocation5 + $0x90] sm:$0xff]
    %v81 = vld [vmem:[#allocation5 + $0x98] sm:$0xff]
    %v82 = vld [vmem:[#allocation5 + $0xa0] sm:$0xff]
    %v83 = vld [vmem:[#allocation5 + $0xa8] sm:$0xff]
    %v84 = vld [vmem:[#allocation5 + $0xb0] sm:$0xff]
    %v85 = vld [vmem:[#allocation5 + $0xb8] sm:$0xff]
    %v86 = vld [vmem:[#allocation5 + $0xc0] sm:$0xff]
    %v87 = vld [vmem:[#allocation5 + $0xc8] sm:$0xff]
    %v88 = vld [vmem:[#allocation5 + $0xd0] sm:$0xff]
    %v89 = vld [vmem:[#allocation5 + $0xd8] sm:$0xff]
    %v90 = vld [vmem:[#allocation5 + $0xe0] sm:$0xff]
    %v91 = vld [vmem:[#allocation5 + $0xe8] sm:$0xff]
    %v92 = vld [vmem:[#allocation5 + $0xf0] sm:$0xff]
    %v93 = vld [vmem:[#allocation5 + $0xf8] sm:$0xff]
    %v94 = vld [vmem:[#allocation5 + $0x100] sm:$0xff]
    %v95 = vld [vmem:[#allocation5 + $0x108] sm:$0xff]
    %v96 = vld [vmem:[#allocation5 + $0x110] sm:$0xff]
    %v97 = vld [vmem:[#allocation5 + $0x118] sm:$0xff]
    %v98 = vld [vmem:[#allocation5 + $0x120] sm:$0xff]
    %v99 = vld [vmem:[#allocation5 + $0x128] sm:$0xff]
    %v100 = vld [vmem:[#allocation5 + $0x130] sm:$0xff]
    %v101 = vld [vmem:[#allocation5 + $0x138] sm:$0xff]
    %v102 = vld [vmem:[#allocation5 + $0x140] sm:$0xff]
    %v103 = vld [vmem:[#allocation5 + $0x148] sm:$0xff]
    %v104 = vld [vmem:[#allocation5 + $0x150] sm:$0xff]
    %v105 = vld [vmem:[#allocation5 + $0x158] sm:$0xff]
    %v106 = vld [vmem:[#allocation5 + $0x160] sm:$0xff]
    %v107 = vld [vmem:[#allocation5 + $0x168] sm:$0xff]
    %v108 = vld [vmem:[#allocation5 + $0x170] sm:$0xff]
    %v109 = vld [vmem:[#allocation5 + $0x178] sm:$0xff]
    %v110 = vld [vmem:[#allocation5 + $0x180] sm:$0xff]
    %v111 = vld [vmem:[#allocation5 + $0x188] sm:$0xff]
    %v112 = vld [vmem:[#allocation5 + $0x190] sm:$0xff]
    %v113 = vld [vmem:[#allocation5 + $0x198] sm:$0xff]
    %v114 = vld [vmem:[#allocation5 + $0x1a0] sm:$0xff]
    %v115 = vld [vmem:[#allocation5 + $0x1a8] sm:$0xff]
    %v116 = vld [vmem:[#allocation5 + $0x1b0] sm:$0xff]
    %v117 = vld [vmem:[#allocation5 + $0x1b8] sm:$0xff]
    %v118 = vld [vmem:[#allocation5 + $0x1c0] sm:$0xff]
    %v119 = vld [vmem:[#allocation5 + $0x1c8] sm:$0xff]
    %v120 = vld [vmem:[#allocation5 + $0x1d0] sm:$0xff]
    %v121 = vld [vmem:[#allocation5 + $0x1d8] sm:$0xff]
    %v122 = vld [vmem:[#allocation5 + $0x1e0] sm:$0xff]
    %v123 = vld [vmem:[#allocation5 + $0x1e8] sm:$0xff]
    %v124 = vld [vmem:[#allocation5 + $0x1f0] sm:$0xff]
    %v125 = vld [vmem:[#allocation5 + $0x1f8] sm:$0xff]
    %v126 = vld [vmem:[#allocation5 + $0x200] sm:$0xff]
    %v127 = vld [vmem:[#allocation5 + $0x208] sm:$0xff]
    %v128 = vld [vmem:[#allocation5 + $0x210] sm:$0xff]
    %v129 = vld [vmem:[#allocation5 + $0x218] sm:$0xff]
    %v130 = vld [vmem:[#allocation5 + $0x220] sm:$0xff]
    %v131 = vld [vmem:[#allocation5 + $0x228] sm:$0xff]
    %v132 = vld [vmem:[%s4] ss:$8 sm:$0x3]
    %v134 = vlaneseq
    %v135 = vshrl.u32 %v134, 7
    %v136 = vsub.s32 0, %v135
    %v137 = vrot.slane %v61, %v136
    %v138 = vlaneseq
    %v139 = vshrl.u32 %v138, 7
    %v140 = vsub.s32 1, %v139
    %v141 = vrot.slane %v61, %v140
    %v142 = vlaneseq
    %v143 = vshrl.u32 %v142, 7
    %v144 = vsub.s32 2, %v143
    %v145 = vrot.slane %v61, %v144
    %v149 = vlaneseq
    %v150 = vshrl.u32 %v149, 7
    %v151 = vsub.s32 0, %v150
    %v152 = vrot.slane %v132, %v151
    %v153 = vlaneseq
    %v154 = vshrl.u32 %v153, 7
    %v155 = vsub.s32 1, %v154
    %v156 = vrot.slane %v132, %v155
    %vm159 = vcmask 195584
    %v160 = vsel %vm159, %v145, 0
    %162 = vmatprep.subr.mxu0 %v93
    %163 = vmatpush1.msra.mxu0 %v92
    %164 = vmatprep.subr.mxu0 %v91
    %165 = vmatpush1.msra.mxu0 %v90
    %166 = vmatprep.subr.mxu0 %v89
    %167 = vmatpush1.msra.mxu0 %v88
    %168 = vmatprep.subr.mxu0 %v87
    %169 = vmatpush1.msra.mxu0 %v86
    %170 = vmatprep.subr.mxu0 %v85
    %171 = vmatpush1.msra.mxu0 %v84
    %172 = vmatprep.subr.mxu0 %v83
    %173 = vmatpush1.msra.mxu0 %v82
    %174 = vmatprep.subr.mxu0 %v81
    %175 = vmatpush1.msra.mxu0 %v80
    %176 = vmatprep.subr.mxu0 %v79
    %177 = vmatpush1.msra.mxu0 %v78
    %178 = vmatprep.subr.mxu0 %v77
    %179 = vmatpush1.msra.mxu0 %v76
    %180 = vmatprep.subr.mxu0 %v75
    %181 = vmatpush1.msra.mxu0 %v74
    %182 = vmatprep.subr.mxu0 %v73
    %183 = vmatpush1.msra.mxu0 %v72
    %184 = vmatprep.subr.mxu0 %v71
    %185 = vmatpush1.msra.mxu0 %v70
    %186 = vmatprep.subr.mxu0 %v69
    %187 = vmatpush1.msra.mxu0 %v68
    %188 = vmatprep.subr.mxu0 %v67
    %189 = vmatpush1.msra.mxu0 %v66
    %190 = vmatprep.subr.mxu0 %v65
    %191 = vmatpush1.msra.mxu0 %v64
    %192 = vmatprep.subr.mxu0 %v63
    %193 = vmatpush1.msra.mxu0 %v62
    %194 = vmatprep.subr.mxu0 %v125
    %195 = vmatpush2.msra.mxu0 %v124
    %196 = vmatprep.subr.mxu0 %v123
    %197 = vmatpush2.msra.mxu0 %v122
    %198 = vmatprep.subr.mxu0 %v121
    %199 = vmatpush2.msra.mxu0 %v120
    %200 = vmatprep.subr.mxu0 %v119
    %201 = vmatpush2.msra.mxu0 %v118
    %202 = vmatprep.subr.mxu0 %v117
    %203 = vmatpush2.msra.mxu0 %v116
    %204 = vmatprep.subr.mxu0 %v115
    %205 = vmatpush2.msra.mxu0 %v114
    %206 = vmatprep.subr.mxu0 %v113
    %207 = vmatpush2.msra.mxu0 %v112
    %208 = vmatprep.subr.mxu0 %v111
    %209 = vmatpush2.msra.mxu0 %v110
    %210 = vmatprep.subr.mxu0 %v109
    %211 = vmatpush2.msra.mxu0 %v108
    %212 = vmatprep.subr.mxu0 %v107
    %213 = vmatpush2.msra.mxu0 %v106
    %214 = vmatprep.subr.mxu0 %v105
    %215 = vmatpush2.msra.mxu0 %v104
    %216 = vmatprep.subr.mxu0 %v103
    %217 = vmatpush2.msra.mxu0 %v102
    %218 = vmatprep.subr.mxu0 %v101
    %219 = vmatpush2.msra.mxu0 %v100
    %220 = vmatprep.subr.mxu0 %v99
    %221 = vmatpush2.msra.mxu0 %v98
    %222 = vmatprep.subr.mxu0 %v97
    %223 = vmatpush2.msra.mxu0 %v96
    %224 = vmatprep.subr.mxu0 %v95
    %225 = vmatpush2.msra.mxu0 %v94
    %226 = vmatprep.mubr.f32.mxu0 %v141
    %227 = vmatmul.mubr.f32.gmra.mxu0 %v137
    %v228 = vpop.f32.mrf.mxu0
    %v229 = vadd.f32 %v152, %v228
    %v230 = vpop.f32.mrf.mxu0
    %v231 = vadd.f32 %v156, %v230
    %232 = vdwg.mxu0
    %233 = vmatprep.subr.mxu0 0.0
    %234 = vmatpush1.msra.mxu0 0.0
    %235 = vmatprep.subr.mxu0 0.0
    %236 = vmatpush1.msra.mxu0 0.0
    %237 = vmatprep.subr.mxu0 0.0
    %238 = vmatpush1.msra.mxu0 0.0
    %239 = vmatprep.subr.mxu0 0.0
    %240 = vmatpush1.msra.mxu0 0.0
    %241 = vmatprep.subr.mxu0 0.0
    %242 = vmatpush1.msra.mxu0 0.0
    %243 = vmatprep.subr.mxu0 0.0
    %244 = vmatpush1.msra.mxu0 0.0
    %245 = vmatprep.subr.mxu0 0.0
    %246 = vmatpush1.msra.mxu0 0.0
    %247 = vmatprep.subr.mxu0 0.0
    %248 = vmatpush1.msra.mxu0 0.0
    %249 = vmatprep.subr.mxu0 0.0
    %250 = vmatpush1.msra.mxu0 0.0
    %251 = vmatprep.subr.mxu0 0.0
    %252 = vmatpush1.msra.mxu0 0.0
    %253 = vmatprep.subr.mxu0 0.0
    %254 = vmatpush1.msra.mxu0 0.0
    %255 = vmatprep.subr.mxu0 0.0
    %256 = vmatpush1.msra.mxu0 0.0
    %257 = vmatprep.subr.mxu0 0.0
    %258 = vmatpush1.msra.mxu0 0.0
    %259 = vmatprep.subr.mxu0 %v131
    %260 = vmatpush1.msra.mxu0 %v130
    %261 = vmatprep.subr.mxu0 %v129
    %262 = vmatpush1.msra.mxu0 %v128
    %263 = vmatprep.subr.mxu0 %v127
    %264 = vmatpush1.msra.mxu0 %v126
    %265 = vmatprep.subr.mxu0 0.0
    %266 = vmatpush2.msra.mxu0 0.0
    %267 = vmatprep.subr.mxu0 0.0
    %268 = vmatpush2.msra.mxu0 0.0
    %269 = vmatprep.subr.mxu0 0.0
    %270 = vmatpush2.msra.mxu0 0.0
    %271 = vmatprep.subr.mxu0 0.0
    %272 = vmatpush2.msra.mxu0 0.0
    %273 = vmatprep.subr.mxu0 0.0
    %274 = vmatpush2.msra.mxu0 0.0
    %275 = vmatprep.subr.mxu0 0.0
    %276 = vmatpush2.msra.mxu0 0.0
    %277 = vmatprep.subr.mxu0 0.0
    %278 = vmatpush2.msra.mxu0 0.0
    %279 = vmatprep.subr.mxu0 0.0
    %280 = vmatpush2.msra.mxu0 0.0
    %281 = vmatprep.subr.mxu0 0.0
    %282 = vmatpush2.msra.mxu0 0.0
    %283 = vmatprep.subr.mxu0 0.0
    %284 = vmatpush2.msra.mxu0 0.0
    %285 = vmatprep.subr.mxu0 0.0
    %286 = vmatpush2.msra.mxu0 0.0
    %287 = vmatprep.subr.mxu0 0.0
    %288 = vmatpush2.msra.mxu0 0.0
    %289 = vmatprep.subr.mxu0 0.0
    %290 = vmatpush2.msra.mxu0 0.0
    %291 = vmatprep.subr.mxu0 0.0
    %292 = vmatpush2.msra.mxu0 0.0
    %293 = vmatprep.subr.mxu0 0.0
    %294 = vmatpush2.msra.mxu0 0.0
    %295 = vmatprep.subr.mxu0 0.0
    %296 = vmatpush2.msra.mxu0 0.0
    %297 = vmatprep.mubr.f32.mxu0 0.0
    %298 = vmatmul.mubr.f32.gmra.mxu0 %v160
    %v299 = vpop.f32.mrf.mxu0
    %v300 = vadd.f32 %v229, %v299
    %v301 = vpop.f32.mrf.mxu0
    %v302 = vadd.f32 %v231, %v301
    %303 = vdwg.mxu0
    %v304 = vtanh.pop %v300
    %v305 = vtanh.pop %v302
    %s306 = sld [smem:[#allocation2]]
    %s307 = sld [smem:[#allocation2 + $0x1]]
    %v308 = vld [vmem:[#allocation6] sm:$0xff]
    %v309 = vld [vmem:[#allocation6 + $0x8] sm:$0xff]
    %v310 = vld [vmem:[#allocation6 + $0x10] sm:$0xff]
    %v311 = vld [vmem:[#allocation6 + $0x18] sm:$0xff]
    %v312 = vld [vmem:[#allocation6 + $0x20] sm:$0xff]
    %v313 = vld [vmem:[#allocation6 + $0x28] sm:$0xff]
    %v314 = vld [vmem:[#allocation6 + $0x30] sm:$0xff]
    %v315 = vld [vmem:[#allocation6 + $0x38] sm:$0xff]
    %v316 = vld [vmem:[#allocation6 + $0x40] sm:$0xff]
    %v317 = vld [vmem:[#allocation6 + $0x48] sm:$0xff]
    %v318 = vld [vmem:[#allocation6 + $0x50] sm:$0xff]
    %v319 = vld [vmem:[#allocation6 + $0x58] sm:$0xff]
    %v320 = vld [vmem:[#allocation6 + $0x60] sm:$0xff]
    %v321 = vld [vmem:[#allocation6 + $0x68] sm:$0xff]
    %v322 = vld [vmem:[#allocation6 + $0x70] sm:$0xff]
    %v323 = vld [vmem:[#allocation6 + $0x78] sm:$0xff]
    %v324 = vld [vmem:[#allocation6 + $0x80] sm:$0xff]
    %v325 = vld [vmem:[#allocation6 + $0x88] sm:$0xff]
    %v326 = vld [vmem:[#allocation6 + $0x90] sm:$0xff]
    %v327 = vld [vmem:[#allocation6 + $0x98] sm:$0xff]
    %v328 = vld [vmem:[#allocation6 + $0xa0] sm:$0xff]
    %v329 = vld [vmem:[#allocation6 + $0xa8] sm:$0xff]
    %v330 = vld [vmem:[#allocation6 + $0xb0] sm:$0xff]
    %v331 = vld [vmem:[#allocation6 + $0xb8] sm:$0xff]
    %v332 = vld [vmem:[#allocation6 + $0xc0] sm:$0xff]
    %v333 = vld [vmem:[#allocation6 + $0xc8] sm:$0xff]
    %v334 = vld [vmem:[#allocation6 + $0xd0] sm:$0xff]
    %v335 = vld [vmem:[#allocation6 + $0xd8] sm:$0xff]
    %v336 = vld [vmem:[#allocation6 + $0xe0] sm:$0xff]
    %v337 = vld [vmem:[#allocation6 + $0xe8] sm:$0xff]
    %v338 = vld [vmem:[#allocation6 + $0xf0] sm:$0xff]
    %v339 = vld [vmem:[#allocation6 + $0xf8] sm:$0xff]
    %v340 = vld [vmem:[%s4 + $0x1] ss:$0 sm:$0xff]
    %341 = vmatprep.subr.mxu0 0.0
    %342 = vmatpush1.msra.mxu0 %v323
    %343 = vmatprep.subr.mxu0 0.0
    %344 = vmatpush1.msra.mxu0 %v322
    %345 = vmatprep.subr.mxu0 0.0
    %346 = vmatpush1.msra.mxu0 %v321
    %347 = vmatprep.subr.mxu0 0.0
    %348 = vmatpush1.msra.mxu0 %v320
    %349 = vmatprep.subr.mxu0 0.0
    %350 = vmatpush1.msra.mxu0 %v319
    %351 = vmatprep.subr.mxu0 0.0
    %352 = vmatpush1.msra.mxu0 %v318
    %353 = vmatprep.subr.mxu0 0.0
    %354 = vmatpush1.msra.mxu0 %v317
    %355 = vmatprep.subr.mxu0 0.0
    %356 = vmatpush1.msra.mxu0 %v316
    %357 = vmatprep.subr.mxu0 0.0
    %358 = vmatpush1.msra.mxu0 %v315
    %359 = vmatprep.subr.mxu0 0.0
    %360 = vmatpush1.msra.mxu0 %v314
    %361 = vmatprep.subr.mxu0 0.0
    %362 = vmatpush1.msra.mxu0 %v313
    %363 = vmatprep.subr.mxu0 0.0
    %364 = vmatpush1.msra.mxu0 %v312
    %365 = vmatprep.subr.mxu0 0.0
    %366 = vmatpush1.msra.mxu0 %v311
    %367 = vmatprep.subr.mxu0 0.0
    %368 = vmatpush1.msra.mxu0 %v310
    %369 = vmatprep.subr.mxu0 0.0
    %370 = vmatpush1.msra.mxu0 %v309
    %371 = vmatprep.subr.mxu0 0.0
    %372 = vmatpush1.msra.mxu0 %v308
    %373 = vmatprep.subr.mxu0 0.0
    %374 = vmatpush2.msra.mxu0 %v339
    %375 = vmatprep.subr.mxu0 0.0
    %376 = vmatpush2.msra.mxu0 %v338
    %377 = vmatprep.subr.mxu0 0.0
    %378 = vmatpush2.msra.mxu0 %v337
    %379 = vmatprep.subr.mxu0 0.0
    %380 = vmatpush2.msra.mxu0 %v336
    %381 = vmatprep.subr.mxu0 0.0
    %382 = vmatpush2.msra.mxu0 %v335
    %383 = vmatprep.subr.mxu0 0.0
    %384 = vmatpush2.msra.mxu0 %v334
    %385 = vmatprep.subr.mxu0 0.0
    %386 = vmatpush2.msra.mxu0 %v333
    %387 = vmatprep.subr.mxu0 0.0
    %388 = vmatpush2.msra.mxu0 %v332
    %389 = vmatprep.subr.mxu0 0.0
    %390 = vmatpush2.msra.mxu0 %v331
    %391 = vmatprep.subr.mxu0 0.0
    %392 = vmatpush2.msra.mxu0 %v330
    %393 = vmatprep.subr.mxu0 0.0
    %394 = vmatpush2.msra.mxu0 %v329
    %395 = vmatprep.subr.mxu0 0.0
    %396 = vmatpush2.msra.mxu0 %v328
    %397 = vmatprep.subr.mxu0 0.0
    %398 = vmatpush2.msra.mxu0 %v327
    %399 = vmatprep.subr.mxu0 0.0
    %400 = vmatpush2.msra.mxu0 %v326
    %401 = vmatprep.subr.mxu0 0.0
    %402 = vmatpush2.msra.mxu0 %v325
    %403 = vmatprep.subr.mxu0 0.0
    %404 = vmatpush2.msra.mxu0 %v324
    %405 = vmatprep.mubr.f32.mxu0 %v305
    %406 = vmatmul.mubr.f32.gmra.mxu0 %v304
    %v407 = vpop.f32.mrf.mxu0
    %v408 = vadd.f32 %v340, %v407
    %v409 = vpop.f32.mrf.mxu0
    %410 = vdwg.mxu0
    %v411 = vld [vmem:[%s4 + $0x5] ss:$0 sm:$0xff]
    %v412 = vstv %s306
    %v413 = vmul.f32 %v412, %v411
    %v414 = vadd.f32 %v408, %v413
    %v415 = vld [vmem:[%s4 + $0x6] ss:$0 sm:$0xff]
    %v416 = vstv %s307
    %v417 = vmul.f32 %v416, %v415
    %v418 = vadd.f32 %v414, %v417
    %v419 = vtanh.pop %v418
    %v420 = vld [vmem:[#allocation6 + $0x100] sm:$0xff]
    %v421 = vld [vmem:[#allocation6 + $0x108] sm:$0xff]
    %v422 = vld [vmem:[#allocation6 + $0x110] sm:$0xff]
    %v423 = vld [vmem:[#allocation6 + $0x118] sm:$0xff]
    %v424 = vld [vmem:[#allocation6 + $0x120] sm:$0xff]
    %v425 = vld [vmem:[#allocation6 + $0x128] sm:$0xff]
    %v426 = vld [vmem:[#allocation6 + $0x130] sm:$0xff]
    %v427 = vld [vmem:[#allocation6 + $0x138] sm:$0xff]
    %v428 = vld [vmem:[#allocation6 + $0x140] sm:$0xff]
    %v429 = vld [vmem:[#allocation6 + $0x148] sm:$0xff]
    %v430 = vld [vmem:[#allocation6 + $0x150] sm:$0xff]
    %v431 = vld [vmem:[#allocation6 + $0x158] sm:$0xff]
    %v432 = vld [vmem:[#allocation6 + $0x160] sm:$0xff]
    %v433 = vld [vmem:[#allocation6 + $0x168] sm:$0xff]
    %v434 = vld [vmem:[#allocation6 + $0x170] sm:$0xff]
    %v435 = vld [vmem:[#allocation6 + $0x178] sm:$0xff]
    %v436 = vld [vmem:[%s4 + $0x2] ss:$0 sm:$0xff]
    %437 = vmatprep.subr.mxu0 0.0
    %438 = vmatpush1.msra.mxu0 %v435
    %439 = vmatprep.subr.mxu0 0.0
    %440 = vmatpush1.msra.mxu0 %v434
    %441 = vmatprep.subr.mxu0 0.0
    %442 = vmatpush1.msra.mxu0 %v433
    %443 = vmatprep.subr.mxu0 0.0
    %444 = vmatpush1.msra.mxu0 %v432
    %445 = vmatprep.subr.mxu0 0.0
    %446 = vmatpush1.msra.mxu0 %v431
    %447 = vmatprep.subr.mxu0 0.0
    %448 = vmatpush1.msra.mxu0 %v430
    %449 = vmatprep.subr.mxu0 0.0
    %450 = vmatpush1.msra.mxu0 %v429
    %451 = vmatprep.subr.mxu0 0.0
    %452 = vmatpush1.msra.mxu0 %v428
    %453 = vmatprep.subr.mxu0 0.0
    %454 = vmatpush1.msra.mxu0 %v427
    %455 = vmatprep.subr.mxu0 0.0
    %456 = vmatpush1.msra.mxu0 %v426
    %457 = vmatprep.subr.mxu0 0.0
    %458 = vmatpush1.msra.mxu0 %v425
    %459 = vmatprep.subr.mxu0 0.0
    %460 = vmatpush1.msra.mxu0 %v424
    %461 = vmatprep.subr.mxu0 0.0
    %462 = vmatpush1.msra.mxu0 %v423
    %463 = vmatprep.subr.mxu0 0.0
    %464 = vmatpush1.msra.mxu0 %v422
    %465 = vmatprep.subr.mxu0 0.0
    %466 = vmatpush1.msra.mxu0 %v421
    %467 = vmatprep.subr.mxu0 0.0
    %468 = vmatpush1.msra.mxu0 %v420
    %469 = vmatprep.subr.mxu0 0.0
    %470 = vmatpush2.msra.mxu0 0.0
    %471 = vmatprep.subr.mxu0 0.0
    %472 = vmatpush2.msra.mxu0 0.0
    %473 = vmatprep.subr.mxu0 0.0
    %474 = vmatpush2.msra.mxu0 0.0
    %475 = vmatprep.subr.mxu0 0.0
    %476 = vmatpush2.msra.mxu0 0.0
    %477 = vmatprep.subr.mxu0 0.0
    %478 = vmatpush2.msra.mxu0 0.0
    %479 = vmatprep.subr.mxu0 0.0
    %480 = vmatpush2.msra.mxu0 0.0
    %481 = vmatprep.subr.mxu0 0.0
    %482 = vmatpush2.msra.mxu0 0.0
    %483 = vmatprep.subr.mxu0 0.0
    %484 = vmatpush2.msra.mxu0 0.0
    %485 = vmatprep.subr.mxu0 0.0
    %486 = vmatpush2.msra.mxu0 0.0
    %487 = vmatprep.subr.mxu0 0.0
    %488 = vmatpush2.msra.mxu0 0.0
    %489 = vmatprep.subr.mxu0 0.0
    %490 = vmatpush2.msra.mxu0 0.0
    %491 = vmatprep.subr.mxu0 0.0
    %492 = vmatpush2.msra.mxu0 0.0
    %493 = vmatprep.subr.mxu0 0.0
    %494 = vmatpush2.msra.mxu0 0.0
    %495 = vmatprep.subr.mxu0 0.0
    %496 = vmatpush2.msra.mxu0 0.0
    %497 = vmatprep.subr.mxu0 0.0
    %498 = vmatpush2.msra.mxu0 0.0
    %499 = vmatprep.subr.mxu0 0.0
    %500 = vmatpush2.msra.mxu0 0.0
    %501 = vmatprep.mubr.f32.mxu0 0.0
    %502 = vmatmul.mubr.f32.gmra.mxu0 %v419
    %v503 = vpop.f32.mrf.mxu0
    %v504 = vadd.f32 %v436, %v503
    %v505 = vpop.f32.mrf.mxu0
    %506 = vdwg.mxu0
    %v507 = vtanh.pop %v504
    %v508 = vld [vmem:[#allocation6 + $0x180] sm:$0xff]
    %v509 = vld [vmem:[#allocation6 + $0x188] sm:$0xff]
    %v510 = vld [vmem:[#allocation6 + $0x190] sm:$0xff]
    %v511 = vld [vmem:[#allocation6 + $0x198] sm:$0xff]
    %v512 = vld [vmem:[#allocation6 + $0x1a0] sm:$0xff]
    %v513 = vld [vmem:[#allocation6 + $0x1a8] sm:$0xff]
    %v514 = vld [vmem:[#allocation6 + $0x1b0] sm:$0xff]
    %v515 = vld [vmem:[#allocation6 + $0x1b8] sm:$0xff]
    %v516 = vld [vmem:[#allocation6 + $0x1c0] sm:$0xff]
    %v517 = vld [vmem:[#allocation6 + $0x1c8] sm:$0xff]
    %v518 = vld [vmem:[#allocation6 + $0x1d0] sm:$0xff]
    %v519 = vld [vmem:[#allocation6 + $0x1d8] sm:$0xff]
    %v520 = vld [vmem:[#allocation6 + $0x1e0] sm:$0xff]
    %v521 = vld [vmem:[#allocation6 + $0x1e8] sm:$0xff]
    %v522 = vld [vmem:[#allocation6 + $0x1f0] sm:$0xff]
    %v523 = vld [vmem:[#allocation6 + $0x1f8] sm:$0xff]
    %v524 = vld [vmem:[%s4 + $0x3] ss:$0 sm:$0xff]
    %525 = vmatprep.subr.mxu0 0.0
    %526 = vmatpush1.msra.mxu0 %v523
    %527 = vmatprep.subr.mxu0 0.0
    %528 = vmatpush1.msra.mxu0 %v522
    %529 = vmatprep.subr.mxu0 0.0
    %530 = vmatpush1.msra.mxu0 %v521
    %531 = vmatprep.subr.mxu0 0.0
    %532 = vmatpush1.msra.mxu0 %v520
    %533 = vmatprep.subr.mxu0 0.0
    %534 = vmatpush1.msra.mxu0 %v519
    %535 = vmatprep.subr.mxu0 0.0
    %536 = vmatpush1.msra.mxu0 %v518
    %537 = vmatprep.subr.mxu0 0.0
    %538 = vmatpush1.msra.mxu0 %v517
    %539 = vmatprep.subr.mxu0 0.0
    %540 = vmatpush1.msra.mxu0 %v516
    %541 = vmatprep.subr.mxu0 0.0
    %542 = vmatpush1.msra.mxu0 %v515
    %543 = vmatprep.subr.mxu0 0.0
    %544 = vmatpush1.msra.mxu0 %v514
    %545 = vmatprep.subr.mxu0 0.0
    %546 = vmatpush1.msra.mxu0 %v513
    %547 = vmatprep.subr.mxu0 0.0
    %548 = vmatpush1.msra.mxu0 %v512
    %549 = vmatprep.subr.mxu0 0.0
    %550 = vmatpush1.msra.mxu0 %v511
    %551 = vmatprep.subr.mxu0 0.0
    %552 = vmatpush1.msra.mxu0 %v510
    %553 = vmatprep.subr.mxu0 0.0
    %554 = vmatpush1.msra.mxu0 %v509
    %555 = vmatprep.subr.mxu0 0.0
    %556 = vmatpush1.msra.mxu0 %v508
    %557 = vmatprep.subr.mxu0 0.0
    %558 = vmatpush2.msra.mxu0 0.0
    %559 = vmatprep.subr.mxu0 0.0
    %560 = vmatpush2.msra.mxu0 0.0
    %561 = vmatprep.subr.mxu0 0.0
    %562 = vmatpush2.msra.mxu0 0.0
    %563 = vmatprep.subr.mxu0 0.0
    %564 = vmatpush2.msra.mxu0 0.0
    %565 = vmatprep.subr.mxu0 0.0
    %566 = vmatpush2.msra.mxu0 0.0
    %567 = vmatprep.subr.mxu0 0.0
    %568 = vmatpush2.msra.mxu0 0.0
    %569 = vmatprep.subr.mxu0 0.0
    %570 = vmatpush2.msra.mxu0 0.0
    %571 = vmatprep.subr.mxu0 0.0
    %572 = vmatpush2.msra.mxu0 0.0
    %573 = vmatprep.subr.mxu0 0.0
    %574 = vmatpush2.msra.mxu0 0.0
    %575 = vmatprep.subr.mxu0 0.0
    %576 = vmatpush2.msra.mxu0 0.0
    %577 = vmatprep.subr.mxu0 0.0
    %578 = vmatpush2.msra.mxu0 0.0
    %579 = vmatprep.subr.mxu0 0.0
    %580 = vmatpush2.msra.mxu0 0.0
    %581 = vmatprep.subr.mxu0 0.0
    %582 = vmatpush2.msra.mxu0 0.0
    %583 = vmatprep.subr.mxu0 0.0
    %584 = vmatpush2.msra.mxu0 0.0
    %585 = vmatprep.subr.mxu0 0.0
    %586 = vmatpush2.msra.mxu0 0.0
    %587 = vmatprep.subr.mxu0 0.0
    %588 = vmatpush2.msra.mxu0 0.0
    %589 = vmatprep.mubr.f32.mxu0 0.0
    %590 = vmatmul.mubr.f32.gmra.mxu0 %v507
    %v591 = vpop.f32.mrf.mxu0
    %v592 = vadd.f32 %v524, %v591
    %v593 = vpop.f32.mrf.mxu0
    %594 = vdwg.mxu0
    %v595 = vtanh.pop %v592
    %v596 = vld [vmem:[#allocation6 + $0x200] sm:$0xff]
    %v597 = vld [vmem:[#allocation6 + $0x208] sm:$0xff]
    %v598 = vld [vmem:[#allocation6 + $0x210] sm:$0xff]
    %v599 = vld [vmem:[#allocation6 + $0x218] sm:$0xff]
    %v600 = vld [vmem:[#allocation6 + $0x220] sm:$0xff]
    %v601 = vld [vmem:[#allocation6 + $0x228] sm:$0xff]
    %v602 = vld [vmem:[#allocation6 + $0x230] sm:$0xff]
    %v603 = vld [vmem:[#allocation6 + $0x238] sm:$0xff]
    %v604 = vld [vmem:[#allocation6 + $0x240] sm:$0xff]
    %v605 = vld [vmem:[#allocation6 + $0x248] sm:$0xff]
    %v606 = vld [vmem:[#allocation6 + $0x250] sm:$0xff]
    %v607 = vld [vmem:[#allocation6 + $0x258] sm:$0xff]
    %v608 = vld [vmem:[#allocation6 + $0x260] sm:$0xff]
    %v609 = vld [vmem:[#allocation6 + $0x268] sm:$0xff]
    %v610 = vld [vmem:[#allocation6 + $0x270] sm:$0xff]
    %v611 = vld [vmem:[#allocation6 + $0x278] sm:$0xff]
    %v612 = vld [vmem:[%s4 + $0x4] ss:$0 sm:$0xff]
    %613 = vmatprep.subr.mxu0 0.0
    %614 = vmatpush1.msra.mxu0 %v611
    %615 = vmatprep.subr.mxu0 0.0
    %616 = vmatpush1.msra.mxu0 %v610
    %617 = vmatprep.subr.mxu0 0.0
    %618 = vmatpush1.msra.mxu0 %v609
    %619 = vmatprep.subr.mxu0 0.0
    %620 = vmatpush1.msra.mxu0 %v608
    %621 = vmatprep.subr.mxu0 0.0
    %622 = vmatpush1.msra.mxu0 %v607
    %623 = vmatprep.subr.mxu0 0.0
    %624 = vmatpush1.msra.mxu0 %v606
    %625 = vmatprep.subr.mxu0 0.0
    %626 = vmatpush1.msra.mxu0 %v605
    %627 = vmatprep.subr.mxu0 0.0
    %628 = vmatpush1.msra.mxu0 %v604
    %629 = vmatprep.subr.mxu0 0.0
    %630 = vmatpush1.msra.mxu0 %v603
    %631 = vmatprep.subr.mxu0 0.0
    %632 = vmatpush1.msra.mxu0 %v602
    %633 = vmatprep.subr.mxu0 0.0
    %634 = vmatpush1.msra.mxu0 %v601
    %635 = vmatprep.subr.mxu0 0.0
    %636 = vmatpush1.msra.mxu0 %v600
    %637 = vmatprep.subr.mxu0 0.0
    %638 = vmatpush1.msra.mxu0 %v599
    %639 = vmatprep.subr.mxu0 0.0
    %640 = vmatpush1.msra.mxu0 %v598
    %641 = vmatprep.subr.mxu0 0.0
    %642 = vmatpush1.msra.mxu0 %v597
    %643 = vmatprep.subr.mxu0 0.0
    %644 = vmatpush1.msra.mxu0 %v596
    %645 = vmatprep.subr.mxu0 0.0
    %646 = vmatpush2.msra.mxu0 0.0
    %647 = vmatprep.subr.mxu0 0.0
    %648 = vmatpush2.msra.mxu0 0.0
    %649 = vmatprep.subr.mxu0 0.0
    %650 = vmatpush2.msra.mxu0 0.0
    %651 = vmatprep.subr.mxu0 0.0
    %652 = vmatpush2.msra.mxu0 0.0
    %653 = vmatprep.subr.mxu0 0.0
    %654 = vmatpush2.msra.mxu0 0.0
    %655 = vmatprep.subr.mxu0 0.0
    %656 = vmatpush2.msra.mxu0 0.0
    %657 = vmatprep.subr.mxu0 0.0
    %658 = vmatpush2.msra.mxu0 0.0
    %659 = vmatprep.subr.mxu0 0.0
    %660 = vmatpush2.msra.mxu0 0.0
    %661 = vmatprep.subr.mxu0 0.0
    %662 = vmatpush2.msra.mxu0 0.0
    %663 = vmatprep.subr.mxu0 0.0
    %664 = vmatpush2.msra.mxu0 0.0
    %665 = vmatprep.subr.mxu0 0.0
    %666 = vmatpush2.msra.mxu0 0.0
    %667 = vmatprep.subr.mxu0 0.0
    %668 = vmatpush2.msra.mxu0 0.0
    %669 = vmatprep.subr.mxu0 0.0
    %670 = vmatpush2.msra.mxu0 0.0
    %671 = vmatprep.subr.mxu0 0.0
    %672 = vmatpush2.msra.mxu0 0.0
    %673 = vmatprep.subr.mxu0 0.0
    %674 = vmatpush2.msra.mxu0 0.0
    %675 = vmatprep.subr.mxu0 0.0
    %676 = vmatpush2.msra.mxu0 0.0
    %677 = vmatprep.mubr.f32.mxu0 0.0
    %678 = vmatmul.mubr.f32.gmra.mxu0 %v595
    %v679 = vpop.f32.mrf.mxu0
    %v680 = vadd.f32 %v612, %v679
    %v681 = vpop.f32.mrf.mxu0
    %682 = vdwg.mxu0
    %v683 = vxor.u32 %v680, 2147483648
    %v684 = vmul.f32 %v683, 1.442695
    %v685 = vpow.pop %v684
    %v686 = vadd.f32 %v685, 1.0
    %v687 = vrcp.pop %v686
    %v688 = vmul.f32 1.0, %v687
    %v689 = vsub.f32 %v688, 0.5
    %v690 = vmul.f32 %v689, 0.99
    %v691 = vadd.f32 %v690, 0.5
    %692 = vst [vmem:[%s5] sm:$0x1] %v691
    // Predicated region
    $region34: #{probs.1} parent=1 // pred_check
      _
    $region35: #{probs.1} parent=1 // pred_check_branch
      %694 = sbr.rel (0) target = $region37
    $region36: #{probs.1} parent=1 // pred_region
      _
    $region37: #{probs.1} parent=1 // pred_fallthru
      _
    // Predicated region
    $region38: #{probs.1} parent=1 // pred_check
      _
    $region39: #{probs.1} parent=1 // pred_check_branch
      %696 = sbr.rel (0) target = $region41
    $region40: #{probs.1} parent=1 // pred_region
      _
    $region41: #{probs.1} parent=1 // pred_fallthru
      _
    %697 = vsyncpa [#allocation3], 1
    %698 = vsyncpa [#allocation7], 1
    %699 = vsyncpa [#allocation4], 1

</llo_original>
